<compile_context>
chip_gen: v7x
topology: tpu7x:2x2x1
jax: 0.10.0
libtpu: 0.0.40
codegen_flags: <defaults>
</compile_context>

<pallas_src>
import functools

import jax
import jax.numpy as jnp
import numpy as np
from jax.experimental import pallas as pl
from jax.experimental.pallas import tpu as pltpu

LANES = 128


def _round_up(x, m):
    return ((x + m - 1) // m) * m


def _choose_tiles(n_nodes, tm, tk):
    m_base = _round_up(n_nodes, LANES)
    k_base = _round_up(n_nodes, LANES)
    if tm is None:
        tm = min(512, m_base)
        # Keep >= 2 row tiles when the graph allows it so the "parallel" row
        # axis can shard across both TensorCores on v7x megacore.
        if m_base // tm < 2 and m_base >= 2 * LANES:
            tm = _round_up((m_base + 1) // 2, LANES)
    if tk is None:
        tk = min(1024, k_base)
    return tm, tk


def prepare_graph(adj, *, tm=None, tk=None):
    """One-time per-graph preprocessing (reuse across layers / training steps).

    Pads the adjacency to tile multiples, stores it at 1 byte/elem when it is
    exactly 0/1 (bf16 otherwise), and extracts per-row-tile lists of nonzero
    column blocks used for block-sparse DMA skipping.
    """
    adj_np = np.asarray(jax.device_get(adj), dtype=np.float32)
    n_nodes = adj_np.shape[0]
    assert adj_np.shape == (n_nodes, n_nodes), adj_np.shape

    tm, tk = _choose_tiles(n_nodes, tm, tk)
    m_pad = _round_up(n_nodes, tm)
    k_pad = _round_up(n_nodes, tk)

    padded = np.zeros((m_pad, k_pad), np.float32)
    padded[:n_nodes, :n_nodes] = adj_np

    # Per-row-tile nonzero column-block structure.
    n_i, n_k = m_pad // tm, k_pad // tk
    blk_nnz = np.abs(padded).reshape(n_i, tm, n_k, tk).sum(axis=(1, 3)) > 0.0
    cnt = blk_nnz.sum(axis=1).astype(np.int32)              # (n_i,)
    max_blocks = max(int(cnt.max()), 1)
    ids = np.zeros((n_i, max_blocks), np.int32)
    for i in range(n_i):
        nz = np.nonzero(blk_nnz[i])[0]
        if nz.size:
            ids[i, :nz.size] = nz
            ids[i, nz.size:] = nz[-1]   # repeat last id: padded grid steps hit
                                        # the already-resident block => no DMA.

    # 1 byte/elem adjacency when it is exactly 0/1 (unweighted + self loops);
    # bf16 fallback for weighted / normalized adjacencies.
    is_binary = bool(np.all((adj_np == 0.0) | (adj_np == 1.0)))
    if is_binary:
        adj_dev = jnp.asarray(padded.astype(np.int8))
    else:
        adj_dev = jnp.asarray(padded, dtype=jnp.bfloat16)

    return dict(
        adj=adj_dev,
        blk_cnt=jnp.asarray(cnt),                       # SMEM scalar-prefetch
        blk_ids=jnp.asarray(ids.reshape(-1)),           # flat 1-D (cheap SMEM)
        n_nodes=n_nodes, tm=tm, tk=tk, m_pad=m_pad, k_pad=k_pad,
        max_blocks=max_blocks, nnz_blocks=int(cnt.sum()),
    )


def _xw_kernel(x_ref, w_ref, o_ref):
    # (txw, in_dim) @ (in_dim, out_pad) in f32 on the MXU, rounded to bf16
    # exactly once on the store (single rounding step before the SpMM).
    o_ref[...] = jnp.dot(x_ref[...], w_ref[...],
                         preferred_element_type=jnp.float32).astype(o_ref.dtype)


def _spmm_kernel(cnt_ref, ids_ref, adj_ref, xw_ref, o_ref, *,
                 xw_resident, tk, max_blocks):
    """o[i] = relu(sum_k adj[i, ids[i,k]] @ xw[ids[i,k]]) over nonzero blocks."""
    i = pl.program_id(0)
    k = pl.program_id(1)

    @pl.when(k == 0)
    def _():
        o_ref[...] = jnp.zeros_like(o_ref)

    @pl.when(k < cnt_ref[i])          # skip padded / all-zero block steps
    def _():
        if xw_resident:
            blk = ids_ref[i * max_blocks + k]
            start = pl.multiple_of(blk * tk, tk)
            xw = xw_ref[pl.ds(start, tk), :]
        else:
            xw = xw_ref[...]
        # int8 (or bf16) adjacency tile upcast to bf16 on the VPU, f32 accum.
        o_ref[...] += jnp.dot(adj_ref[...].astype(jnp.bfloat16), xw,
                              preferred_element_type=jnp.float32)

    @pl.when(k == pl.num_programs(1) - 1)
    def _():
        o_ref[...] = jnp.maximum(o_ref[...], 0.0)


def graph_conv_sparse(inputs, weight, graph, *, xw_resident=None):
    """out = relu(adj @ (inputs @ weight)) using a prepared graph (see prepare_graph)."""
    n_nodes, tm, tk = graph["n_nodes"], graph["tm"], graph["tk"]
    m_pad, k_pad = graph["m_pad"], graph["k_pad"]
    max_blocks, nnz_blocks = graph["max_blocks"], graph["nnz_blocks"]
    adj_p = graph["adj"]

    n, in_dim = inputs.shape
    in_dim_w, out_dim = weight.shape
    assert n == n_nodes and in_dim == in_dim_w, (inputs.shape, weight.shape)

    out_pad = _round_up(out_dim, LANES)

    # ---- stage 1: XW = X @ W, computed once (not per adjacency row tile) ----
    x_pad = jnp.pad(inputs.astype(jnp.float32), ((0, k_pad - n_nodes), (0, 0)))
    w_pad = jnp.pad(weight.astype(jnp.float32), ((0, 0), (0, out_pad - out_dim)))
    txw = tk  # divides k_pad by construction
    xw = pl.pallas_call(
        _xw_kernel,
        out_shape=jax.ShapeDtypeStruct((k_pad, out_pad), jnp.bfloat16),
        grid_spec=pltpu.PrefetchScalarGridSpec(
            num_scalar_prefetch=0,
            grid=(k_pad // txw,),
            in_specs=[pl.BlockSpec((txw, in_dim), lambda i: (i, 0)),
                      pl.BlockSpec((in_dim, out_pad), lambda i: (0, 0))],
            out_specs=pl.BlockSpec((txw, out_pad), lambda i: (i, 0)),
        ),
        compiler_params=pltpu.CompilerParams(
            dimension_semantics=("parallel",)),
    )(x_pad, w_pad)

    # ---- stage 2: out = relu(adj @ XW), block-sparse over the adjacency -----
    if xw_resident is None:
        # Keep XW fully VMEM-resident when (double-buffered) it stays small.
        xw_resident = (2 * k_pad * out_pad * 2) <= (8 * 1024 * 1024)

    n_i = m_pad // tm
    grid = (n_i, max_blocks)

    adj_spec = pl.BlockSpec(
        (tm, tk), lambda i, k, cnt, ids: (i, ids[i * max_blocks + k]))
    if xw_resident:
        xw_spec = pl.BlockSpec((k_pad, out_pad), lambda i, k, cnt, ids: (0, 0))
    else:
        xw_spec = pl.BlockSpec(
            (tk, out_pad), lambda i, k, cnt, ids: (ids[i * max_blocks + k], 0))

    adj_bytes = nnz_blocks * tm * tk * adj_p.dtype.itemsize
    xw_bytes = (k_pad * out_pad * 2 if xw_resident
                else nnz_blocks * tk * out_pad * 2)
    cost = pl.CostEstimate(
        flops=int(2 * nnz_blocks * tm * tk * out_pad),
        transcendentals=0,
        bytes_accessed=int(adj_bytes + xw_bytes + m_pad * out_pad * 4))

    kernel = functools.partial(_spmm_kernel, xw_resident=xw_resident,
                               tk=tk, max_blocks=max_blocks)
    out_padded = pl.pallas_call(
        kernel,
        out_shape=jax.ShapeDtypeStruct((m_pad, out_pad), jnp.float32),
        grid_spec=pltpu.PrefetchScalarGridSpec(
            num_scalar_prefetch=2,              # blk_cnt, blk_ids -> SMEM
            grid=grid,
            in_specs=[adj_spec, xw_spec],
            out_specs=pl.BlockSpec((tm, out_pad),
                                   lambda i, k, cnt, ids: (i, 0)),
        ),
        compiler_params=pltpu.CompilerParams(
            dimension_semantics=("parallel", "arbitrary"),
            vmem_limit_bytes=48 * 1024 * 1024,   # v7x-safe; actual use ~2-10 MiB
        ),
        cost_estimate=cost,
    )(graph["blk_cnt"], graph["blk_ids"], adj_p, xw)

    return out_padded[:n_nodes, :out_dim]


def glorot_init(key, input_dim, output_dim):
    init_range = jnp.sqrt(6.0 / (input_dim + output_dim))
    return jax.random.uniform(
        key, (input_dim, output_dim), dtype=jnp.float32,
        minval=-init_range, maxval=init_range)


if __name__ == "__main__":
    key = jax.random.PRNGKey(0)
    k_x, k_w, k_adj, k_x2 = jax.random.split(key, 4)

    # ---------- test 1: unweighted 0/1 adjacency (int8 fast path) ----------
    num_nodes, input_dim, output_dim = 128, 64, 32
    x = jax.random.normal(k_x, (num_nodes, input_dim), dtype=jnp.float32)
    weight = glorot_init(k_w, input_dim, output_dim)
    a = (jax.random.uniform(k_adj, (num_nodes, num_nodes)) < 0.05).astype(jnp.float32)
    adj = jnp.clip(jnp.maximum(a, a.T) + jnp.eye(num_nodes, dtype=jnp.float32), 0.0, 1.0)

    graph = prepare_graph(adj)                       # one-time per-graph prep
    out = graph_conv_sparse(x, weight, graph)        # resident-XW path (auto)
    jax.block_until_ready(out)
    assert out.shape == (num_nodes, output_dim), out.shape

    # Tight check vs a reference with the kernel's single bf16 rounding of XW
    # (the int8 adjacency is exact).
    xw_b = (x @ weight).astype(jnp.bfloat16).astype(jnp.float32)
    ref_tight = jnp.maximum(adj @ xw_b, 0.0)
    assert jnp.allclose(out, ref_tight, atol=1e-2, rtol=1e-2)

    # Looser semantic check vs the pure-f32 PyTorch-equivalent reference.
    ref_f32 = jnp.maximum(adj @ (x @ weight), 0.0)
    assert jnp.allclose(out, ref_f32, atol=1e-1, rtol=5e-2)

    # Also exercise the streamed-XW path and check it matches.
    out_streamed = graph_conv_sparse(x, weight, graph, xw_resident=False)
    jax.block_until_ready(out_streamed)
    assert jnp.allclose(out_streamed, out, atol=1e-5, rtol=1e-5)

    # ---------- test 2: normalized (weighted) adjacency, N not tile-aligned --
    n2 = 200
    x2 = jax.random.normal(k_x2, (n2, input_dim), dtype=jnp.float32)
    w2 = glorot_init(jax.random.fold_in(k_w, 1), input_dim, output_dim)
    a2 = (jax.random.uniform(jax.random.fold_in(k_adj, 1), (n2, n2)) < 0.05).astype(jnp.float32)
    a2 = jnp.clip(jnp.maximum(a2, a2.T) + jnp.eye(n2, dtype=jnp.float32), 0.0, 1.0)
    d_inv_sqrt = 1.0 / jnp.sqrt(jnp.sum(a2, axis=1))
    adj2 = a2 * d_inv_sqrt[:, None] * d_inv_sqrt[None, :]   # non-binary -> bf16 path

    graph2 = prepare_graph(adj2)
    out2 = graph_conv_sparse(x2, w2, graph2)
    jax.block_until_ready(out2)
    assert out2.shape == (n2, output_dim), out2.shape
    ref2 = jnp.maximum(adj2 @ (x2 @ w2), 0.0)
    assert jnp.allclose(out2, ref2, atol=5e-2, rtol=5e-2)

    print("KERNEL_OK")
</pallas_src>

<mosaic_0001>
module attributes {stable_mosaic.version = 11 : i64} {
  func.func @_xw_kernel(%arg0: i32, %arg1: memref<128x64xf32, #tpu.memory_space<vmem>>, %arg2: memref<64x128xf32, #tpu.memory_space<vmem>>, %arg3: memref<128x128xbf16, #tpu.memory_space<vmem>>) attributes {dimension_semantics = [#tpu.dimension_semantics<parallel>], iteration_bounds = array<i64: 1>, scalar_prefetch = 0 : i64, scratch_operands = 0 : i64, tpu.core_type = #tpu.core_type<tc>, window_params = [{transform_indices = @transform_0, window_bounds = array<i64: 128, 64>}, {pipeline_mode = #tpu.pipeline_mode<synchronous>, transform_indices = @transform_1, window_bounds = array<i64: 64, 128>}, {transform_indices = @transform_2, window_bounds = array<i64: 128, 128>}]} {
    %c0 = arith.constant 0 : index
    %c0_0 = arith.constant 0 : index
    %0 = vector.load %arg1[%c0, %c0_0] : memref<128x64xf32, #tpu.memory_space<vmem>>, vector<128x64xf32>
    %c0_1 = arith.constant 0 : index
    %c0_2 = arith.constant 0 : index
    %1 = vector.load %arg2[%c0_1, %c0_2] : memref<64x128xf32, #tpu.memory_space<vmem>>, vector<64x128xf32>
    %cst = arith.constant dense<0.000000e+00> : vector<128x128xf32>
    %2 = tpu.matmul %0, %1, %cst {dimension_numbers = #tpu.dot_dimension_numbers<[1], [0], [0], [1], [0, 0, 1, 1], [], []>} : vector<128x64xf32>, vector<64x128xf32>, vector<128x128xf32> -> vector<128x128xf32>
    %3 = arith.truncf %2 : vector<128x128xf32> to vector<128x128xbf16>
    %c0_3 = arith.constant 0 : index
    %c0_4 = arith.constant 0 : index
    %4 = vector.load %arg3[%c0_3, %c0_4] : memref<128x128xbf16, #tpu.memory_space<vmem>>, vector<128x128xbf16>
    tpu.vector_store %arg3[%c0_3, %c0_4], %3 {strides = array<i32>} : memref<128x128xbf16, #tpu.memory_space<vmem>>, vector<128x128xbf16>,
    return
  }
  func.func @transform_0(%arg0: i32) -> (i32, i32) {
    %c0_i32 = arith.constant 0 : i32
    %c0_i32_0 = arith.constant 0 : i32
    return %arg0, %c0_i32 : i32, i32
  }
  func.func @transform_1(%arg0: i32) -> (i32, i32) {
    %c0_i32 = arith.constant 0 : i32
    %c0_i32_0 = arith.constant 0 : i32
    %c0_i32_1 = arith.constant 0 : i32
    return %c0_i32, %c0_i32_0 : i32, i32
  }
  func.func @transform_2(%arg0: i32) -> (i32, i32) {
    %c0_i32 = arith.constant 0 : i32
    %c0_i32_0 = arith.constant 0 : i32
    return %arg0, %c0_i32 : i32, i32
  }
}

</mosaic_0001>

<llo_original>
// kernel: tpu_custom_call.1
$region0: #{tpu_custom_call.1}
  #allocation0 [shape = 'u32[]', space=smem, size = 0x4, offset = 0x4, fixed_abs, tag = 'smem constant byte address 0x4 - core index']
  #allocation1 [shape = 'u32[144,128]{1,0:T(1,128)}', space=vmem, size = 0x12000, scoped, tag = 'internal scratch']
  %s0 = inlined_call_operand.vmem [shape: f32[128,64], index: 0, kind: input, shape index: {}]
  %s1 = inlined_call_operand.vmem [shape: f32[64,128], index: 1, kind: input, shape index: {}]
  %s2 = inlined_call_operand.hbm [shape: bf16[128,128], index: 2, kind: output, shape index: {}]
  %s3 = sld [smem:[#allocation0]]
  $region18: #{tpu_custom_call.1} parent=0
    _
  %s5 = ssub.s32 1, %s3
  %s6 = scalar_select 0, %s5, %s3
  $region1: #{tpu_custom_call.1} parent=0
    #allocation2 [shape = 'u8[32768]{0}', space=vmem, size = 0x8000, scoped, tag = 'output window, operand 0, single buffered']
    #allocation3 [shape = 's32[1]{0}', space=sflag, size = 0x4, scoped, tag = 'scoped memory for tpu_custom_call.1']
    %7 = vsyncpa [#allocation3], 0
    // Predicated region
    $region2: #{tpu_custom_call.1} parent=1 // pred_check
      _
    $region3: #{tpu_custom_call.1} parent=1 // pred_check_branch
      %9 = sbr.rel (0) target = $region5
    $region4: #{tpu_custom_call.1} parent=1 // pred_region
      _
    $region5: #{tpu_custom_call.1} parent=1 // pred_fallthru
      _
    // Predicated region
    $region6: #{tpu_custom_call.1} parent=1 // pred_check
      _
    $region7: #{tpu_custom_call.1} parent=1 // pred_check_branch
      %11 = sbr.rel (0) target = $region9
    $region8: #{tpu_custom_call.1} parent=1 // pred_region
      _
    $region9: #{tpu_custom_call.1} parent=1 // pred_fallthru
      _
    %v12 = vld [vmem:[%s0] sm:$0xff]
    %v13 = vld [vmem:[%s0 + $0x8] sm:$0xff]
    %v14 = vld [vmem:[%s0 + $0x10] sm:$0xff]
    %v15 = vld [vmem:[%s0 + $0x18] sm:$0xff]
    %v16 = vld [vmem:[%s0 + $0x20] sm:$0xff]
    %v17 = vld [vmem:[%s0 + $0x28] sm:$0xff]
    %v18 = vld [vmem:[%s0 + $0x30] sm:$0xff]
    %v19 = vld [vmem:[%s0 + $0x38] sm:$0xff]
    %v20 = vld [vmem:[%s0 + $0x40] sm:$0xff]
    %v21 = vld [vmem:[%s0 + $0x48] sm:$0xff]
    %v22 = vld [vmem:[%s0 + $0x50] sm:$0xff]
    %v23 = vld [vmem:[%s0 + $0x58] sm:$0xff]
    %v24 = vld [vmem:[%s0 + $0x60] sm:$0xff]
    %v25 = vld [vmem:[%s0 + $0x68] sm:$0xff]
    %v26 = vld [vmem:[%s0 + $0x70] sm:$0xff]
    %v27 = vld [vmem:[%s0 + $0x78] sm:$0xff]
    %v28 = vld [vmem:[%s1] sm:$0xff]
    %v29 = vld [vmem:[%s1 + $0x8] sm:$0xff]
    %v30 = vld [vmem:[%s1 + $0x10] sm:$0xff]
    %v31 = vld [vmem:[%s1 + $0x18] sm:$0xff]
    %v32 = vld [vmem:[%s1 + $0x20] sm:$0xff]
    %v33 = vld [vmem:[%s1 + $0x28] sm:$0xff]
    %v34 = vld [vmem:[%s1 + $0x30] sm:$0xff]
    %v35 = vld [vmem:[%s1 + $0x38] sm:$0xff]
    %vm36 = vcmask 523264
    %v38 = vsel %vm36, %v12, 0
    %v41 = vsel %vm36, %v13, 0
    %v44 = vsel %vm36, %v14, 0
    %v47 = vsel %vm36, %v15, 0
    %v50 = vsel %vm36, %v16, 0
    %v53 = vsel %vm36, %v17, 0
    %v56 = vsel %vm36, %v18, 0
    %v59 = vsel %vm36, %v19, 0
    %v62 = vsel %vm36, %v20, 0
    %v65 = vsel %vm36, %v21, 0
    %v68 = vsel %vm36, %v22, 0
    %v71 = vsel %vm36, %v23, 0
    %v74 = vsel %vm36, %v24, 0
    %v77 = vsel %vm36, %v25, 0
    %v80 = vsel %vm36, %v26, 0
    %v83 = vsel %vm36, %v27, 0
    %85 = vmatprep.subr.mxu0 0.0
    %86 = vmatpush1.msra.mxu0 %v28
    %87 = vmatprep.subr.mxu0 0.0
    %88 = vmatpush1.msra.mxu0 %v29
    %89 = vmatprep.subr.mxu0 0.0
    %90 = vmatpush1.msra.mxu0 %v30
    %91 = vmatprep.subr.mxu0 0.0
    %92 = vmatpush1.msra.mxu0 %v31
    %93 = vmatprep.subr.mxu0 0.0
    %94 = vmatpush1.msra.mxu0 %v32
    %95 = vmatprep.subr.mxu0 0.0
    %96 = vmatpush1.msra.mxu0 %v33
    %97 = vmatprep.subr.mxu0 0.0
    %98 = vmatpush1.msra.mxu0 %v34
    %99 = vmatprep.subr.mxu0 0.0
    %100 = vmatpush1.msra.mxu0 %v35
    %101 = vmatprep.subr.mxu0 0.0
    %102 = vmatpush1.msra.mxu0 0.0
    %103 = vmatprep.subr.mxu0 0.0
    %104 = vmatpush1.msra.mxu0 0.0
    %105 = vmatprep.subr.mxu0 0.0
    %106 = vmatpush1.msra.mxu0 0.0
    %107 = vmatprep.subr.mxu0 0.0
    %108 = vmatpush1.msra.mxu0 0.0
    %109 = vmatprep.subr.mxu0 0.0
    %110 = vmatpush1.msra.mxu0 0.0
    %111 = vmatprep.subr.mxu0 0.0
    %112 = vmatpush1.msra.mxu0 0.0
    %113 = vmatprep.subr.mxu0 0.0
    %114 = vmatpush1.msra.mxu0 0.0
    %115 = vmatprep.subr.mxu0 0.0
    %116 = vmatpush1.msra.mxu0 0.0
    %117 = vmatprep.subr.mxu0 0.0
    %118 = vmatpush1.msra.mxu0 0.0
    %119 = vmatprep.subr.mxu0 0.0
    %120 = vmatpush1.msra.mxu0 0.0
    %121 = vmatprep.subr.mxu0 0.0
    %122 = vmatpush1.msra.mxu0 0.0
    %123 = vmatprep.subr.mxu0 0.0
    %124 = vmatpush1.msra.mxu0 0.0
    %125 = vmatprep.subr.mxu0 0.0
    %126 = vmatpush1.msra.mxu0 0.0
    %127 = vmatprep.subr.mxu0 0.0
    %128 = vmatpush1.msra.mxu0 0.0
    %129 = vmatprep.subr.mxu0 0.0
    %130 = vmatpush1.msra.mxu0 0.0
    %131 = vmatprep.subr.mxu0 0.0
    %132 = vmatpush1.msra.mxu0 0.0
    %133 = vmatprep.subr.mxu0 0.0
    %134 = vmatpush1.msra.mxu0 0.0
    %135 = vmatprep.subr.mxu0 0.0
    %136 = vmatpush1.msra.mxu0 0.0
    %137 = vmatprep.subr.mxu0 0.0
    %138 = vmatpush1.msra.mxu0 0.0
    %139 = vmatprep.subr.mxu0 0.0
    %140 = vmatpush1.msra.mxu0 0.0
    %141 = vmatprep.subr.mxu0 0.0
    %142 = vmatpush1.msra.mxu0 0.0
    %143 = vmatprep.subr.mxu0 0.0
    %144 = vmatpush1.msra.mxu0 0.0
    %145 = vmatprep.subr.mxu0 0.0
    %146 = vmatpush1.msra.mxu0 0.0
    %147 = vmatprep.subr.mxu0 0.0
    %148 = vmatpush1.msra.mxu0 0.0
    %149 = vmatprep.mubr.f32.mxu0 0.0
    %150 = vmatmul.mubr.f32.gmra.mrb[0].mxu0 %v38
    %v151 = vpop.f32.mrb[0].mxu0
    %v152 = vadd.f32 0.0, %v151
    %v153 = vpop.f32.mrb[0].mxu0
    %154 = vmatprep.mubr.f32.mxu0 0.0
    %155 = vmatmul.mubr.f32.gmra.mrb[0].mxu0 %v41
    %v156 = vpop.f32.mrb[0].mxu0
    %v157 = vadd.f32 0.0, %v156
    %v158 = vpop.f32.mrb[0].mxu0
    %159 = vmatprep.mubr.f32.mxu0 0.0
    %160 = vmatmul.mubr.f32.gmra.mrb[0].mxu0 %v44
    %v161 = vpop.f32.mrb[0].mxu0
    %v162 = vadd.f32 0.0, %v161
    %v163 = vpop.f32.mrb[0].mxu0
    %164 = vmatprep.mubr.f32.mxu0 0.0
    %165 = vmatmul.mubr.f32.gmra.mrb[0].mxu0 %v47
    %v166 = vpop.f32.mrb[0].mxu0
    %v167 = vadd.f32 0.0, %v166
    %v168 = vpop.f32.mrb[0].mxu0
    %169 = vmatprep.mubr.f32.mxu0 0.0
    %170 = vmatmul.mubr.f32.gmra.mrb[0].mxu0 %v50
    %v171 = vpop.f32.mrb[0].mxu0
    %v172 = vadd.f32 0.0, %v171
    %v173 = vpop.f32.mrb[0].mxu0
    %174 = vmatprep.mubr.f32.mxu0 0.0
    %175 = vmatmul.mubr.f32.gmra.mrb[0].mxu0 %v53
    %v176 = vpop.f32.mrb[0].mxu0
    %v177 = vadd.f32 0.0, %v176
    %v178 = vpop.f32.mrb[0].mxu0
    %179 = vmatprep.mubr.f32.mxu0 0.0
    %180 = vmatmul.mubr.f32.gmra.mrb[0].mxu0 %v56
    %v181 = vpop.f32.mrb[0].mxu0
    %v182 = vadd.f32 0.0, %v181
    %v183 = vpop.f32.mrb[0].mxu0
    %184 = vmatprep.mubr.f32.mxu0 0.0
    %185 = vmatmul.mubr.f32.gmra.mrb[0].mxu0 %v59
    %v186 = vpop.f32.mrb[0].mxu0
    %v187 = vadd.f32 0.0, %v186
    %v188 = vpop.f32.mrb[0].mxu0
    %189 = vmatprep.mubr.f32.mxu0 0.0
    %190 = vmatmul.mubr.f32.gmra.mrb[0].mxu0 %v62
    %v191 = vpop.f32.mrb[0].mxu0
    %v192 = vadd.f32 0.0, %v191
    %v193 = vpop.f32.mrb[0].mxu0
    %194 = vmatprep.mubr.f32.mxu0 0.0
    %195 = vmatmul.mubr.f32.gmra.mrb[0].mxu0 %v65
    %v196 = vpop.f32.mrb[0].mxu0
    %v197 = vadd.f32 0.0, %v196
    %v198 = vpop.f32.mrb[0].mxu0
    %199 = vmatprep.mubr.f32.mxu0 0.0
    %200 = vmatmul.mubr.f32.gmra.mrb[0].mxu0 %v68
    %v201 = vpop.f32.mrb[0].mxu0
    %v202 = vadd.f32 0.0, %v201
    %v203 = vpop.f32.mrb[0].mxu0
    %204 = vmatprep.mubr.f32.mxu0 0.0
    %205 = vmatmul.mubr.f32.gmra.mrb[0].mxu0 %v71
    %v206 = vpop.f32.mrb[0].mxu0
    %v207 = vadd.f32 0.0, %v206
    %v208 = vpop.f32.mrb[0].mxu0
    %209 = vmatprep.mubr.f32.mxu0 0.0
    %210 = vmatmul.mubr.f32.gmra.mrb[0].mxu0 %v74
    %v211 = vpop.f32.mrb[0].mxu0
    %v212 = vadd.f32 0.0, %v211
    %v213 = vpop.f32.mrb[0].mxu0
    %214 = vmatprep.mubr.f32.mxu0 0.0
    %215 = vmatmul.mubr.f32.gmra.mrb[0].mxu0 %v77
    %v216 = vpop.f32.mrb[0].mxu0
    %v217 = vadd.f32 0.0, %v216
    %v218 = vpop.f32.mrb[0].mxu0
    %219 = vmatprep.mubr.f32.mxu0 0.0
    %220 = vmatmul.mubr.f32.gmra.mrb[0].mxu0 %v80
    %v221 = vpop.f32.mrb[0].mxu0
    %v222 = vadd.f32 0.0, %v221
    %v223 = vpop.f32.mrb[0].mxu0
    %224 = vmatprep.mubr.f32.mxu0 0.0
    %225 = vmatmul.mubr.f32.gmra.mrb[0].mxu0 %v83
    %v226 = vpop.f32.mrb[0].mxu0
    %v227 = vadd.f32 0.0, %v226
    %v228 = vpop.f32.mrb[0].mxu0
    %229 = vdwg.mxu0
    %v230 = vpack.c.bf16 %v157, %v152
    %v231 = vpack.c.bf16 %v167, %v162
    %v232 = vpack.c.bf16 %v177, %v172
    %v233 = vpack.c.bf16 %v187, %v182
    %v234 = vpack.c.bf16 %v197, %v192
    %v235 = vpack.c.bf16 %v207, %v202
    %v236 = vpack.c.bf16 %v217, %v212
    %v237 = vpack.c.bf16 %v227, %v222
    %v246 = vunpack.c.l.b16 %v230
    %v247 = vunpack.c.h.b16 %v230
    %v248 = vunpack.c.l.b16 %v231
    %v249 = vunpack.c.h.b16 %v231
    %v250 = vunpack.c.l.b16 %v232
    %v251 = vunpack.c.h.b16 %v232
    %v252 = vunpack.c.l.b16 %v233
    %v253 = vunpack.c.h.b16 %v233
    %v254 = vunpack.c.l.b16 %v234
    %v255 = vunpack.c.h.b16 %v234
    %v256 = vunpack.c.l.b16 %v235
    %v257 = vunpack.c.h.b16 %v235
    %v258 = vunpack.c.l.b16 %v236
    %v259 = vunpack.c.h.b16 %v236
    %v260 = vunpack.c.l.b16 %v237
    %v261 = vunpack.c.h.b16 %v237
    %v262 = vpack.c.b16 %v246, %v246
    %v263 = vpack.c.b16 %v247, %v247
    %v264 = vpack.c.b16 %v248, %v248
    %v265 = vpack.c.b16 %v249, %v249
    %v266 = vpack.c.b16 %v250, %v250
    %v267 = vpack.c.b16 %v251, %v251
    %v268 = vpack.c.b16 %v252, %v252
    %v269 = vpack.c.b16 %v253, %v253
    %v270 = vpack.c.b16 %v254, %v254
    %v271 = vpack.c.b16 %v255, %v255
    %v272 = vpack.c.b16 %v256, %v256
    %v273 = vpack.c.b16 %v257, %v257
    %v274 = vpack.c.b16 %v258, %v258
    %v275 = vpack.c.b16 %v259, %v259
    %v276 = vpack.c.b16 %v260, %v260
    %v277 = vpack.c.b16 %v261, %v261
    %294 = vst [vmem:[#allocation2] sm:$0xf] %v262
    %295 = vst [vmem:[#allocation2 + $0x4] sm:$0xf] %v263
    %296 = vst [vmem:[#allocation2 + $0x8] sm:$0xf] %v264
    %297 = vst [vmem:[#allocation2 + $0xc] sm:$0xf] %v265
    %298 = vst [vmem:[#allocation2 + $0x10] sm:$0xf] %v266
    %299 = vst [vmem:[#allocation2 + $0x14] sm:$0xf] %v267
    %300 = vst [vmem:[#allocation2 + $0x18] sm:$0xf] %v268
    %301 = vst [vmem:[#allocation2 + $0x1c] sm:$0xf] %v269
    %302 = vst [vmem:[#allocation2 + $0x20] sm:$0xf] %v270
    %303 = vst [vmem:[#allocation2 + $0x24] sm:$0xf] %v271
    %304 = vst [vmem:[#allocation2 + $0x28] sm:$0xf] %v272
    %305 = vst [vmem:[#allocation2 + $0x2c] sm:$0xf] %v273
    %306 = vst [vmem:[#allocation2 + $0x30] sm:$0xf] %v274
    %307 = vst [vmem:[#allocation2 + $0x34] sm:$0xf] %v275
    %308 = vst [vmem:[#allocation2 + $0x38] sm:$0xf] %v276
    %309 = vst [vmem:[#allocation2 + $0x3c] sm:$0xf] %v277
    // Predicated region
    $region10: #{tpu_custom_call.1} parent=1 // pred_check
      _
    $region11: #{tpu_custom_call.1} parent=1 // pred_check_branch
      %311 = sbr.rel (0) target = $region13
    $region12: #{tpu_custom_call.1} parent=1 // pred_region
      %s313 = ssub.s32 1024, 1024
      %314 = vsyncadd [#allocation3], %s313
      %s315 = sshll.u32 [#allocation2], 4
      %s316 = int_to_ptr.vmem [resolvable:$true] %s315
      %321 = dma.vmem_to_hbm [thread:$0]  %s316, 1024, %s2, [#allocation3], 64, 64, 4
    $region13: #{tpu_custom_call.1} parent=1 // pred_fallthru
      _
    // Predicated region
    $region14: #{tpu_custom_call.1} parent=1 // pred_check
      _
    $region15: #{tpu_custom_call.1} parent=1 // pred_check_branch
      %323 = sbr.rel (0) target = $region17
    $region16: #{tpu_custom_call.1} parent=1 // pred_region
      %324 = dma.done [#allocation3], 1024
    $region17: #{tpu_custom_call.1} parent=1 // pred_fallthru
      _
    %325 = vsyncpa [#allocation3], 1

</llo_original>
